<compile_context>
chip_gen: v7x
topology: tpu7x:2x2x1
jax: 0.10.0
libtpu: 0.0.40
codegen_flags: <defaults>
</compile_context>

<pallas_src>
import functools
import math

import jax
import jax.numpy as jnp
from jax.experimental import pallas as pl
from jax.experimental.pallas import tpu as pltpu


# -----------------------------------------------------------------------------
# Gaussian kernel construction (replicates the PyTorch module exactly,
# including its exp(-((x-mean)/(2*sigma))**2) quirk; normalized to sum to 1).
# Returns plain Python floats so they can be baked into the kernel as constants.
# -----------------------------------------------------------------------------
def gaussian_taps_2d(kernel_size=3, sigma=1.0):
    K = int(kernel_size)
    mean = (K - 1) / 2.0
    g1 = [
        1.0 / (sigma * math.sqrt(2.0 * math.pi))
        * math.exp(-(((i - mean) / (2.0 * sigma)) ** 2))
        for i in range(K)
    ]
    k2 = [[g1[i] * g1[j] for j in range(K)] for i in range(K)]
    s = sum(sum(row) for row in k2)
    return [[v / s for v in row] for row in k2]


# -----------------------------------------------------------------------------
# Pallas kernel: reflect-pad into VMEM scratch, then K*K tap accumulation.
# -----------------------------------------------------------------------------
def _make_smoothing_kernel(C, H, W, K, taps):
    P = K // 2  # pad size

    def kernel(x_ref, o_ref, xp_ref):
        # x_ref : (1, C, H, W)           input block (one batch image, all channels)
        # o_ref : (1, C, H, W)           output block
        # xp_ref: (1, C, H+2P, W+2P)     VMEM scratch holding the reflect-padded image
        x = x_ref[...]

        # --- 1) interior ------------------------------------------------------
        xp_ref[:, :, P:P + H, P:P + W] = x

        # --- 2) reflect rows (top/bottom), interior columns only --------------
        # padded row j        <- input row (P - j)
        # padded row H+P+j    <- input row (H - 2 - j)
        for j in range(P):
            xp_ref[:, :, j:j + 1, P:P + W] = x[:, :, P - j:P - j + 1, :]
            xp_ref[:, :, H + P + j:H + P + j + 1, P:P + W] = (
                x[:, :, H - 2 - j:H - 1 - j, :])

        # --- 3) reflect columns over ALL rows (handles corners correctly) -----
        # padded col j        <- padded col (2P - j)
        # padded col W+P+j    <- padded col (P + W - 2 - j)
        for j in range(P):
            xp_ref[:, :, :, j:j + 1] = xp_ref[:, :, :, 2 * P - j:2 * P - j + 1]
            xp_ref[:, :, :, W + P + j:W + P + j + 1] = (
                xp_ref[:, :, :, P + W - 2 - j:P + W - 1 - j])

        # --- 4) K*K tap accumulation over the whole image (VPU, fp32) ---------
        acc = jnp.zeros((1, C, H, W), jnp.float32)
        for kh in range(K):
            for kw in range(K):
                acc = acc + taps[kh][kw] * xp_ref[:, :, kh:kh + H, kw:kw + W].astype(
                    jnp.float32)
        o_ref[...] = acc.astype(o_ref.dtype)

    return kernel


# -----------------------------------------------------------------------------
# Wrapper: single fused pallas_call, grid over batch ("parallel" for v7x 2-TC).
# -----------------------------------------------------------------------------
@functools.partial(jax.jit, static_argnames=("kernel_size", "sigma"))
def gaussian_smoothing(x_nchw, kernel_size=3, sigma=1.0):
    """Equivalent of GaussianSmoothing(channels=C, kernel_size, sigma, dim=2).forward.

    x_nchw: (B, C, H, W) float32, NCHW (PyTorch layout). Returns same shape/layout.
    """
    B, C, H, W = x_nchw.shape
    K = int(kernel_size)
    P = K // 2
    taps = gaussian_taps_2d(K, sigma)  # baked-in constants (hoisted weight prep)

    kernel = _make_smoothing_kernel(C, H, W, K, taps)
    return pl.pallas_call(
        kernel,
        out_shape=jax.ShapeDtypeStruct((B, C, H, W), x_nchw.dtype),
        grid=(B,),
        in_specs=[pl.BlockSpec((1, C, H, W), lambda b: (b, 0, 0, 0))],
        out_specs=pl.BlockSpec((1, C, H, W), lambda b: (b, 0, 0, 0)),
        scratch_shapes=[pltpu.VMEM((1, C, H + 2 * P, W + 2 * P), jnp.float32)],
        compiler_params=pltpu.CompilerParams(dimension_semantics=("parallel",)),
    )(x_nchw)


# -----------------------------------------------------------------------------
# Pure-JAX reference (reflect pad + depthwise conv, highest precision)
# -----------------------------------------------------------------------------
def reference_forward(x, kernel_size=3, sigma=1.0):
    K = int(kernel_size)
    P = K // 2
    C = x.shape[1]
    w2d = jnp.array(gaussian_taps_2d(K, sigma), jnp.float32)          # (K, K)
    w = jnp.broadcast_to(w2d[None, None, :, :], (C, 1, K, K))         # depthwise OIHW
    xp = jnp.pad(x, ((0, 0), (0, 0), (P, P), (P, P)), mode="reflect")
    return jax.lax.conv_general_dilated(
        xp, w, window_strides=(1, 1), padding=[(0, 0), (0, 0)],
        dimension_numbers=("NCHW", "OIHW", "NCHW"),
        feature_group_count=C,
        precision=jax.lax.Precision.HIGHEST)


if __name__ == "__main__":
    key = jax.random.PRNGKey(0)
    # GaussianSmoothing(channels=4, kernel_size=3, sigma=1.0, dim=2) on a
    # (B=2, C=4, H=16, W=16) NCHW input.
    x = jax.random.normal(key, (2, 4, 16, 16), jnp.float32)

    out = gaussian_smoothing(x, kernel_size=3, sigma=1.0)
    out = jax.block_until_ready(out)
    assert out.shape == x.shape, out.shape

    ref = reference_forward(x, kernel_size=3, sigma=1.0)
    max_err = float(jnp.max(jnp.abs(out - ref)))
    assert max_err < 1e-5, f"mismatch vs reference: {max_err}"

    print("KERNEL_OK")
</pallas_src>

<mosaic_0001>
module attributes {stable_mosaic.version = 11 : i64} {
  func.func @kernel(%arg0: i32, %arg1: memref<1x4x16x16xf32, #tpu.memory_space<vmem>>, %arg2: memref<1x4x16x16xf32, #tpu.memory_space<vmem>>, %arg3: memref<1x4x18x18xf32, #tpu.memory_space<vmem>>) attributes {dimension_semantics = [#tpu.dimension_semantics<parallel>], iteration_bounds = array<i64: 2>, scalar_prefetch = 0 : i64, scratch_operands = 1 : i64, tpu.core_type = #tpu.core_type<tc>, window_params = [{transform_indices = @transform_0, window_bounds = array<i64: 1, 4, 16, 16>}, {transform_indices = @transform_1, window_bounds = array<i64: 1, 4, 16, 16>}]} {
    %c0 = arith.constant 0 : index
    %c0_0 = arith.constant 0 : index
    %c0_1 = arith.constant 0 : index
    %c0_2 = arith.constant 0 : index
    %0 = vector.load %arg1[%c0, %c0_0, %c0_1, %c0_2] : memref<1x4x16x16xf32, #tpu.memory_space<vmem>>, vector<1x4x16x16xf32>
    %c0_3 = arith.constant 0 : index
    %c0_4 = arith.constant 0 : index
    %c1 = arith.constant 1 : index
    %c1_5 = arith.constant 1 : index
    %1 = vector.load %arg3[%c0_3, %c0_4, %c1, %c1_5] : memref<1x4x18x18xf32, #tpu.memory_space<vmem>>, vector<1x4x16x16xf32>
    tpu.vector_store %arg3[%c0_3, %c0_4, %c1, %c1_5], %0 {strides = array<i32>} : memref<1x4x18x18xf32, #tpu.memory_space<vmem>>, vector<1x4x16x16xf32>,
    %2 = vector.extract_strided_slice %0 {offsets = [0, 0, 1, 0], sizes = [1, 4, 1, 16], strides = [1, 1, 1, 1]} : vector<1x4x16x16xf32> to vector<1x4x1x16xf32>
    %c0_6 = arith.constant 0 : index
    %c0_7 = arith.constant 0 : index
    %c0_8 = arith.constant 0 : index
    %c1_9 = arith.constant 1 : index
    %3 = vector.load %arg3[%c0_6, %c0_7, %c0_8, %c1_9] : memref<1x4x18x18xf32, #tpu.memory_space<vmem>>, vector<1x4x1x16xf32>
    tpu.vector_store %arg3[%c0_6, %c0_7, %c0_8, %c1_9], %2 {strides = array<i32>} : memref<1x4x18x18xf32, #tpu.memory_space<vmem>>, vector<1x4x1x16xf32>,
    %4 = vector.extract_strided_slice %0 {offsets = [0, 0, 14, 0], sizes = [1, 4, 1, 16], strides = [1, 1, 1, 1]} : vector<1x4x16x16xf32> to vector<1x4x1x16xf32>
    %c0_10 = arith.constant 0 : index
    %c0_11 = arith.constant 0 : index
    %c17 = arith.constant 17 : index
    %c1_12 = arith.constant 1 : index
    %5 = vector.load %arg3[%c0_10, %c0_11, %c17, %c1_12] : memref<1x4x18x18xf32, #tpu.memory_space<vmem>>, vector<1x4x1x16xf32>
    tpu.vector_store %arg3[%c0_10, %c0_11, %c17, %c1_12], %4 {strides = array<i32>} : memref<1x4x18x18xf32, #tpu.memory_space<vmem>>, vector<1x4x1x16xf32>,
    %c0_13 = arith.constant 0 : index
    %c0_14 = arith.constant 0 : index
    %c0_15 = arith.constant 0 : index
    %c2 = arith.constant 2 : index
    %6 = vector.load %arg3[%c0_13, %c0_14, %c0_15, %c2] : memref<1x4x18x18xf32, #tpu.memory_space<vmem>>, vector<1x4x18x1xf32>
    %c0_16 = arith.constant 0 : index
    %c0_17 = arith.constant 0 : index
    %c0_18 = arith.constant 0 : index
    %c0_19 = arith.constant 0 : index
    %7 = vector.load %arg3[%c0_16, %c0_17, %c0_18, %c0_19] : memref<1x4x18x18xf32, #tpu.memory_space<vmem>>, vector<1x4x18x1xf32>
    tpu.vector_store %arg3[%c0_16, %c0_17, %c0_18, %c0_19], %6 {strides = array<i32>} : memref<1x4x18x18xf32, #tpu.memory_space<vmem>>, vector<1x4x18x1xf32>,
    %c0_20 = arith.constant 0 : index
    %c0_21 = arith.constant 0 : index
    %c0_22 = arith.constant 0 : index
    %c15 = arith.constant 15 : index
    %8 = vector.load %arg3[%c0_20, %c0_21, %c0_22, %c15] : memref<1x4x18x18xf32, #tpu.memory_space<vmem>>, vector<1x4x18x1xf32>
    %c0_23 = arith.constant 0 : index
    %c0_24 = arith.constant 0 : index
    %c0_25 = arith.constant 0 : index
    %c17_26 = arith.constant 17 : index
    %9 = vector.load %arg3[%c0_23, %c0_24, %c0_25, %c17_26] : memref<1x4x18x18xf32, #tpu.memory_space<vmem>>, vector<1x4x18x1xf32>
    tpu.vector_store %arg3[%c0_23, %c0_24, %c0_25, %c17_26], %8 {strides = array<i32>} : memref<1x4x18x18xf32, #tpu.memory_space<vmem>>, vector<1x4x18x1xf32>,
    %cst = arith.constant 0.000000e+00 : f32
    %10 = vector.broadcast %cst : f32 to vector<1x4x16x16xf32>
    %c0_27 = arith.constant 0 : index
    %c0_28 = arith.constant 0 : index
    %c0_29 = arith.constant 0 : index
    %c0_30 = arith.constant 0 : index
    %11 = vector.load %arg3[%c0_27, %c0_28, %c0_29, %c0_30] : memref<1x4x18x18xf32, #tpu.memory_space<vmem>>, vector<1x4x16x16xf32>
    %cst_31 = arith.constant 0.0927228927 : f32
    %12 = vector.broadcast %cst_31 : f32 to vector<1x4x16x16xf32>
    %13 = arith.mulf %12, %11 : vector<1x4x16x16xf32>
    %14 = arith.addf %10, %13 : vector<1x4x16x16xf32>
    %c0_32 = arith.constant 0 : index
    %c0_33 = arith.constant 0 : index
    %c0_34 = arith.constant 0 : index
    %c1_35 = arith.constant 1 : index
    %15 = vector.load %arg3[%c0_32, %c0_33, %c0_34, %c1_35] : memref<1x4x18x18xf32, #tpu.memory_space<vmem>>, vector<1x4x16x16xf32>
    %cst_36 = arith.constant 0.119058557 : f32
    %16 = vector.broadcast %cst_36 : f32 to vector<1x4x16x16xf32>
    %17 = arith.mulf %16, %15 : vector<1x4x16x16xf32>
    %18 = arith.addf %14, %17 : vector<1x4x16x16xf32>
    %c0_37 = arith.constant 0 : index
    %c0_38 = arith.constant 0 : index
    %c0_39 = arith.constant 0 : index
    %c2_40 = arith.constant 2 : index
    %19 = vector.load %arg3[%c0_37, %c0_38, %c0_39, %c2_40] : memref<1x4x18x18xf32, #tpu.memory_space<vmem>>, vector<1x4x16x16xf32>
    %cst_41 = arith.constant 0.0927228927 : f32
    %20 = vector.broadcast %cst_41 : f32 to vector<1x4x16x16xf32>
    %21 = arith.mulf %20, %19 : vector<1x4x16x16xf32>
    %22 = arith.addf %18, %21 : vector<1x4x16x16xf32>
    %c0_42 = arith.constant 0 : index
    %c0_43 = arith.constant 0 : index
    %c1_44 = arith.constant 1 : index
    %c0_45 = arith.constant 0 : index
    %23 = vector.load %arg3[%c0_42, %c0_43, %c1_44, %c0_45] : memref<1x4x18x18xf32, #tpu.memory_space<vmem>>, vector<1x4x16x16xf32>
    %cst_46 = arith.constant 0.119058557 : f32
    %24 = vector.broadcast %cst_46 : f32 to vector<1x4x16x16xf32>
    %25 = arith.mulf %24, %23 : vector<1x4x16x16xf32>
    %26 = arith.addf %22, %25 : vector<1x4x16x16xf32>
    %c0_47 = arith.constant 0 : index
    %c0_48 = arith.constant 0 : index
    %c1_49 = arith.constant 1 : index
    %c1_50 = arith.constant 1 : index
    %27 = vector.load %arg3[%c0_47, %c0_48, %c1_49, %c1_50] : memref<1x4x18x18xf32, #tpu.memory_space<vmem>>, vector<1x4x16x16xf32>
    %cst_51 = arith.constant 0.152874202 : f32
    %28 = vector.broadcast %cst_51 : f32 to vector<1x4x16x16xf32>
    %29 = arith.mulf %28, %27 : vector<1x4x16x16xf32>
    %30 = arith.addf %26, %29 : vector<1x4x16x16xf32>
    %c0_52 = arith.constant 0 : index
    %c0_53 = arith.constant 0 : index
    %c1_54 = arith.constant 1 : index
    %c2_55 = arith.constant 2 : index
    %31 = vector.load %arg3[%c0_52, %c0_53, %c1_54, %c2_55] : memref<1x4x18x18xf32, #tpu.memory_space<vmem>>, vector<1x4x16x16xf32>
    %cst_56 = arith.constant 0.119058557 : f32
    %32 = vector.broadcast %cst_56 : f32 to vector<1x4x16x16xf32>
    %33 = arith.mulf %32, %31 : vector<1x4x16x16xf32>
    %34 = arith.addf %30, %33 : vector<1x4x16x16xf32>
    %c0_57 = arith.constant 0 : index
    %c0_58 = arith.constant 0 : index
    %c2_59 = arith.constant 2 : index
    %c0_60 = arith.constant 0 : index
    %35 = vector.load %arg3[%c0_57, %c0_58, %c2_59, %c0_60] : memref<1x4x18x18xf32, #tpu.memory_space<vmem>>, vector<1x4x16x16xf32>
    %cst_61 = arith.constant 0.0927228927 : f32
    %36 = vector.broadcast %cst_61 : f32 to vector<1x4x16x16xf32>
    %37 = arith.mulf %36, %35 : vector<1x4x16x16xf32>
    %38 = arith.addf %34, %37 : vector<1x4x16x16xf32>
    %c0_62 = arith.constant 0 : index
    %c0_63 = arith.constant 0 : index
    %c2_64 = arith.constant 2 : index
    %c1_65 = arith.constant 1 : index
    %39 = vector.load %arg3[%c0_62, %c0_63, %c2_64, %c1_65] : memref<1x4x18x18xf32, #tpu.memory_space<vmem>>, vector<1x4x16x16xf32>
    %cst_66 = arith.constant 0.119058557 : f32
    %40 = vector.broadcast %cst_66 : f32 to vector<1x4x16x16xf32>
    %41 = arith.mulf %40, %39 : vector<1x4x16x16xf32>
    %42 = arith.addf %38, %41 : vector<1x4x16x16xf32>
    %c0_67 = arith.constant 0 : index
    %c0_68 = arith.constant 0 : index
    %c2_69 = arith.constant 2 : index
    %c2_70 = arith.constant 2 : index
    %43 = vector.load %arg3[%c0_67, %c0_68, %c2_69, %c2_70] : memref<1x4x18x18xf32, #tpu.memory_space<vmem>>, vector<1x4x16x16xf32>
    %cst_71 = arith.constant 0.0927228927 : f32
    %44 = vector.broadcast %cst_71 : f32 to vector<1x4x16x16xf32>
    %45 = arith.mulf %44, %43 : vector<1x4x16x16xf32>
    %46 = arith.addf %42, %45 : vector<1x4x16x16xf32>
    %c0_72 = arith.constant 0 : index
    %c0_73 = arith.constant 0 : index
    %c0_74 = arith.constant 0 : index
    %c0_75 = arith.constant 0 : index
    %47 = vector.load %arg2[%c0_72, %c0_73, %c0_74, %c0_75] : memref<1x4x16x16xf32, #tpu.memory_space<vmem>>, vector<1x4x16x16xf32>
    tpu.vector_store %arg2[%c0_72, %c0_73, %c0_74, %c0_75], %46 {strides = array<i32>} : memref<1x4x16x16xf32, #tpu.memory_space<vmem>>, vector<1x4x16x16xf32>,
    return
  }
  func.func @transform_0(%arg0: i32) -> (i32, i32, i32, i32) {
    %c0_i32 = arith.constant 0 : i32
    %c0_i32_0 = arith.constant 0 : i32
    %c0_i32_1 = arith.constant 0 : i32
    %c0_i32_2 = arith.constant 0 : i32
    return %arg0, %c0_i32, %c0_i32_0, %c0_i32_1 : i32, i32, i32, i32
  }
  func.func @transform_1(%arg0: i32) -> (i32, i32, i32, i32) {
    %c0_i32 = arith.constant 0 : i32
    %c0_i32_0 = arith.constant 0 : i32
    %c0_i32_1 = arith.constant 0 : i32
    %c0_i32_2 = arith.constant 0 : i32
    return %arg0, %c0_i32, %c0_i32_0, %c0_i32_1 : i32, i32, i32, i32
  }
}

</mosaic_0001>

<llo_original>
// kernel: gaussian_smoothing.1
$region0: #{gaussian_smoothing.1}
  #allocation0 [shape = 'u32[]', space=smem, size = 0x4, offset = 0x4, fixed_abs, tag = 'smem constant byte address 0x4 - core index']
  #allocation1 [shape = 'u32[144,128]{1,0:T(1,128)}', space=vmem, size = 0x12000, scoped, tag = 'internal scratch']
  #allocation2 [shape = 'f32[1,4,18,18]{3,2,1,0:T(8,128)}', space=vmem, size = 0xc000, scoped, tag = 'scratch operand']
  %s0 = inlined_call_operand.hbm [shape: f32[2,4,16,16], index: 0, kind: input, shape index: {}]
  %s1 = inlined_call_operand.hbm [shape: f32[2,4,16,16], index: 1, kind: output, shape index: {}]
  %s2 = sld [smem:[#allocation0]]
  $region41: #{gaussian_smoothing.1} parent=0
    _
  %s4 = ssub.s32 1, %s2
  %s5 = scalar_select 0, %s4, %s2
  $region1: #{gaussian_smoothing.1} parent=0
    #allocation3 [shape = 'u8[65536]{0}', space=vmem, size = 0x10000, scoped, tag = 'input window, operand 0']
    #allocation4 [shape = 's32[2]{0}', space=sflag, size = 0x8, scoped, tag = 'scoped memory for gaussian_smoothing.1']
    #allocation5 [shape = 's32[2]{0}', space=sflag, size = 0x8, scoped, tag = 'scoped memory for gaussian_smoothing.1']
    #allocation6 [shape = 'u8[65536]{0}', space=vmem, size = 0x10000, scoped, tag = 'output window, operand 0']
    %6 = vsyncpa [#allocation4], 0
    %s7 = scalar_lea.sflag [#allocation4], 1
    %8 = vsyncpa %s7, 0
    %9 = vsyncpa [#allocation5], 0
    %s10 = scalar_lea.sflag [#allocation5], 1
    %11 = vsyncpa %s10, 0
    loop: start=0, step=1, limit=4
    $region2: #{gaussian_smoothing.1} parent=1 // loop_pre_header
      _
    $region3: #{gaussian_smoothing.1} parent=1 // loop_header
      %s13 = sphi 0, %s17
      %p14 = scmp.ge.s32.totalorder %s13, 4
      %s23 = sphi 0, %s25
      %s26 = sphi 0, %s23
      %s27 = sphi 0, %s26
      %s43 = sphi 0, %s27
      %s49 = sphi 0, %s51
      %s52 = sphi 0, %s49
      %s53 = sphi 0, %s52
      %s69 = sphi 0, %s53
    $region4: #{gaussian_smoothing.1} parent=1 // loop_header_branch
      %16 = sbr.rel (%p14) target = $region8
    $region5: #{gaussian_smoothing.1} parent=1 // loop_body
      %s18 = ssub.s32 %s13, 1
      %s19 = ssub.s32 %s13, 2
      %s20 = sadd.s32 %s13, 1
      %s21 = ssub.s32 %s13, %s20
      %p22 = scmp.eq.s32.totalorder %s21, 0
      %s24 = sadd.s32 %s23, 1
      %s25 = scalar_select %p22, %s23, %s24
      %p28 = pneg %p22
      %p29 = scmp.eq.s32.totalorder %s13, 1
      %p30 = por %p28, %p29
      %p31 = scmp.ne.s32.totalorder %s23, %s26
      %p32 = scmp.eq.s32.totalorder %s13, 0
      %p33 = por %p31, %p32
      %p34 = scmp.ne.s32.totalorder %s23, %s26
      %p35 = scmp.eq.s32.totalorder %s18, 1
      %p36 = por %p34, %p35
      %p37 = scmp.ne.s32.totalorder %s26, %s27
      %p38 = scmp.eq.s32.totalorder %s18, 0
      %p39 = por %p37, %p38
      %p40 = scmp.ne.s32.totalorder %s26, %s27
      %p41 = scmp.eq.s32.totalorder %s19, 1
      %p42 = por %p40, %p41
      %p44 = scmp.ne.s32.totalorder %s27, %s43
      %p45 = scmp.eq.s32.totalorder %s19, 0
      %p46 = por %p44, %p45
      %s47 = ssub.s32 %s13, %s20
      %p48 = scmp.eq.s32.totalorder %s47, 0
      %s50 = sadd.s32 %s49, 1
      %s51 = scalar_select %p48, %s49, %s50
      %p54 = pneg %p48
      %p55 = scmp.eq.s32.totalorder %s13, 1
      %p56 = por %p54, %p55
      %p57 = scmp.ne.s32.totalorder %s49, %s52
      %p58 = scmp.eq.s32.totalorder %s13, 0
      %p59 = por %p57, %p58
      %p60 = scmp.ne.s32.totalorder %s49, %s52
      %p61 = scmp.eq.s32.totalorder %s18, 1
      %p62 = por %p60, %p61
      %p63 = scmp.ne.s32.totalorder %s52, %s53
      %p64 = scmp.eq.s32.totalorder %s18, 0
      %p65 = por %p63, %p64
      %p66 = scmp.ne.s32.totalorder %s52, %s53
      %p67 = scmp.eq.s32.totalorder %s19, 1
      %p68 = por %p66, %p67
      %p70 = scmp.ne.s32.totalorder %s53, %s69
      %p71 = scmp.eq.s32.totalorder %s19, 0
      %p72 = por %p70, %p71
      %p73 = scmp.le.s32.totalorder 1, %s13
      %p74 = scmp.lt.s32.totalorder %s13, 3
      %p75 = pnand %p73, %p74
      %p76 = pneg %p75
      // Predicated region
      $region9: #{gaussian_smoothing.1} parent=5 // pred_check
        _
      $region10: #{gaussian_smoothing.1} parent=5 // pred_check_branch
        %78 = sbr.rel (%p75) target = $region12
      $region11: #{gaussian_smoothing.1} parent=5 // pred_region
        %s79 = ssub.s32 %s13, 1
      $region12: #{gaussian_smoothing.1} parent=5 // pred_fallthru
        _
      %p80 = scmp.lt.s32.totalorder %s13, 2
      // Predicated region
      $region13: #{gaussian_smoothing.1} parent=5 // pred_check
        %p81 = pneg %p80
      $region14: #{gaussian_smoothing.1} parent=5 // pred_check_branch
        %83 = sbr.rel (%p81) target = $region16
      $region15: #{gaussian_smoothing.1} parent=5 // pred_region
        // Predicated region
        $region17: #{gaussian_smoothing.1} parent=15 // pred_check
          %p84 = pneg %p33
        $region18: #{gaussian_smoothing.1} parent=15 // pred_check_branch
          %86 = sbr.rel (%p84) target = $region20
        $region19: #{gaussian_smoothing.1} parent=15 // pred_region
          %s87 = sand.u32 %s23, 1
          %s88 = scalar_lea.sflag [#allocation4], %s87
          %s89 = sand.u32 %s23, 1
          %s90 = smul.addr %s89, 64
          %s91 = scalar_lea.vmem [#allocation3], %s90
          %s93 = ssub.s32 1024, 1024
          %94 = vsyncadd %s88, %s93
          %s95 = smul.addr %s13, 8
          %s96 = smul.addr %s95, 128
          %s97 = scalar_lea.hbm %s0, %s96
          %s98 = sshll.u32 %s91, 4
          %s99 = int_to_ptr.vmem [resolvable:$true] %s98
          %104 = dma.hbm_to_vmem [thread:$0]  %s97, 1024, %s99, %s88, 128, 128, 8
        $region20: #{gaussian_smoothing.1} parent=15 // pred_fallthru
          _
      $region16: #{gaussian_smoothing.1} parent=5 // pred_fallthru
        _
      %p105 = scmp.le.s32.totalorder 1, %s13
      %p106 = scmp.lt.s32.totalorder %s13, 3
      %p107 = pnand %p105, %p106
      %p108 = pneg %p107
      // Predicated region
      $region21: #{gaussian_smoothing.1} parent=5 // pred_check
        _
      $region22: #{gaussian_smoothing.1} parent=5 // pred_check_branch
        %110 = sbr.rel (%p107) target = $region24
      $region23: #{gaussian_smoothing.1} parent=5 // pred_region
        %s111 = ssub.s32 %s13, 1
        %s112 = sand.u32 %s26, 1
        %s113 = scalar_lea.sflag [#allocation4], %s112
        %s114 = sand.u32 %s26, 1
        %s115 = smul.addr %s114, 64
        %s116 = scalar_lea.vmem [#allocation3], %s115
        // Predicated region
        $region25: #{gaussian_smoothing.1} parent=23 // pred_check
          %p117 = pneg %p39
        $region26: #{gaussian_smoothing.1} parent=23 // pred_check_branch
          %119 = sbr.rel (%p117) target = $region28
        $region27: #{gaussian_smoothing.1} parent=23 // pred_region
          %120 = dma.done %s113, 1024
        $region28: #{gaussian_smoothing.1} parent=23 // pred_fallthru
          _
        %s121 = sand.u32 %s26, 1
        %s122 = scalar_lea.sflag [#allocation4], %s121
        %s123 = sand.u32 %s26, 1
        %s124 = smul.addr %s123, 64
        %s125 = scalar_lea.vmem [#allocation3], %s124
        %p126 = pneg %p39
        %p127 = pneg %p36
        %p128 = pneg %p65
        %p129 = pneg %p62
        %s130 = sand.u32 %s52, 1
        %s131 = scalar_lea.sflag [#allocation5], %s130
        %s132 = sand.u32 %s52, 1
        %s133 = smul.addr %s132, 64
        %s134 = scalar_lea.vmem [#allocation6], %s133
        %v135 = vld [vmem:[%s116] sm:$0xff]
        %v136 = vld [vmem:[%s116 + $0x8] sm:$0xff]
        %v137 = vld [vmem:[%s116 + $0x10] sm:$0xff]
        %v138 = vld [vmem:[%s116 + $0x18] sm:$0xff]
        %v139 = vld [vmem:[%s116 + $0x20] sm:$0xff]
        %v140 = vld [vmem:[%s116 + $0x28] sm:$0xff]
        %v141 = vld [vmem:[%s116 + $0x30] sm:$0xff]
        %v142 = vld [vmem:[%s116 + $0x38] sm:$0xff]
        %151 = vrot.lane.b32.xlu0 %v135, 1
        %v152 = vpop.permute.xlu0 %151
        %153 = vrot.lane.b32.xlu0 %v136, 1
        %v154 = vpop.permute.xlu0 %153
        %155 = vrot.lane.b32.xlu0 %v137, 1
        %v156 = vpop.permute.xlu0 %155
        %157 = vrot.lane.b32.xlu0 %v138, 1
        %v158 = vpop.permute.xlu0 %157
        %159 = vrot.lane.b32.xlu0 %v139, 1
        %v160 = vpop.permute.xlu0 %159
        %161 = vrot.lane.b32.xlu0 %v140, 1
        %v162 = vpop.permute.xlu0 %161
        %163 = vrot.lane.b32.xlu0 %v141, 1
        %v164 = vpop.permute.xlu0 %163
        %165 = vrot.lane.b32.xlu0 %v142, 1
        %v166 = vpop.permute.xlu0 %165
        %vm175 = vcmask 138248
        %176 = vst.msk [vmem:[#allocation2 + $0x1] sm:$0xff] %vm175, %v152
        %177 = vst.msk [vmem:[#allocation2 + $0x9] sm:$0xff] %vm175, %v154
        %178 = vst.msk [vmem:[#allocation2 + $0x19] sm:$0xff] %vm175, %v156
        %179 = vst.msk [vmem:[#allocation2 + $0x21] sm:$0xff] %vm175, %v158
        %180 = vst.msk [vmem:[#allocation2 + $0x31] sm:$0xff] %vm175, %v160
        %181 = vst.msk [vmem:[#allocation2 + $0x39] sm:$0xff] %vm175, %v162
        %182 = vst.msk [vmem:[#allocation2 + $0x49] sm:$0xff] %vm175, %v164
        %183 = vst.msk [vmem:[#allocation2 + $0x51] sm:$0xff] %vm175, %v166
        %vm184 = vcmask 132105
        %185 = vst.msk [vmem:[#allocation2 - $0x1] sm:$0x2] %vm184, %v152
        %186 = vst.msk [vmem:[#allocation2 + $0x17] sm:$0x2] %vm184, %v156
        %187 = vst.msk [vmem:[#allocation2 + $0x2f] sm:$0x2] %vm184, %v160
        %188 = vst.msk [vmem:[#allocation2 + $0x47] sm:$0x2] %vm184, %v164
        %vm189 = vcmask 137230
        %190 = vst.msk [vmem:[#allocation2 + $0xb] sm:$0x40] %vm189, %v154
        %191 = vst.msk [vmem:[#allocation2 + $0x23] sm:$0x40] %vm189, %v158
        %192 = vst.msk [vmem:[#allocation2 + $0x3b] sm:$0x40] %vm189, %v162
        %193 = vst.msk [vmem:[#allocation2 + $0x53] sm:$0x40] %vm189, %v166
        %v194 = vld [vmem:[#allocation2] sm:$0xff]
        %v195 = vld [vmem:[#allocation2 + $0x8] sm:$0xff]
        %v196 = vld [vmem:[#allocation2 + $0x10] sm:$0x3]
        %v197 = vld [vmem:[#allocation2 + $0x18] sm:$0xff]
        %v198 = vld [vmem:[#allocation2 + $0x20] sm:$0xff]
        %v199 = vld [vmem:[#allocation2 + $0x28] sm:$0x3]
        %v200 = vld [vmem:[#allocation2 + $0x30] sm:$0xff]
        %v201 = vld [vmem:[#allocation2 + $0x38] sm:$0xff]
        %v202 = vld [vmem:[#allocation2 + $0x40] sm:$0x3]
        %v203 = vld [vmem:[#allocation2 + $0x48] sm:$0xff]
        %v204 = vld [vmem:[#allocation2 + $0x50] sm:$0xff]
        %v205 = vld [vmem:[#allocation2 + $0x58] sm:$0x3]
        %218 = vrot.lane.b32.xlu0 %v194, 126
        %v219 = vpop.permute.xlu0 %218
        %220 = vrot.lane.b32.xlu0 %v195, 126
        %v221 = vpop.permute.xlu0 %220
        %222 = vrot.lane.b32.xlu0 %v196, 126
        %v223 = vpop.permute.xlu0 %222
        %224 = vrot.lane.b32.xlu0 %v197, 126
        %v225 = vpop.permute.xlu0 %224
        %226 = vrot.lane.b32.xlu0 %v198, 126
        %v227 = vpop.permute.xlu0 %226
        %228 = vrot.lane.b32.xlu0 %v199, 126
        %v229 = vpop.permute.xlu0 %228
        %230 = vrot.lane.b32.xlu0 %v200, 126
        %v231 = vpop.permute.xlu0 %230
        %232 = vrot.lane.b32.xlu0 %v201, 126
        %v233 = vpop.permute.xlu0 %232
        %234 = vrot.lane.b32.xlu0 %v202, 126
        %v235 = vpop.permute.xlu0 %234
        %236 = vrot.lane.b32.xlu0 %v203, 126
        %v237 = vpop.permute.xlu0 %236
        %238 = vrot.lane.b32.xlu0 %v204, 126
        %v239 = vpop.permute.xlu0 %238
        %240 = vrot.lane.b32.xlu0 %v205, 126
        %v241 = vpop.permute.xlu0 %240
        %vm254 = vcmask 7168
        %255 = vst.msk [vmem:[#allocation2] sm:$0xff] %vm254, %v219
        %256 = vst.msk [vmem:[#allocation2 + $0x8] sm:$0xff] %vm254, %v221
        %vm257 = vcmask 1024
        %258 = vst.msk [vmem:[#allocation2 + $0x10] sm:$0x3] %vm257, %v223
        %259 = vst.msk [vmem:[#allocation2 + $0x18] sm:$0xff] %vm254, %v225
        %260 = vst.msk [vmem:[#allocation2 + $0x20] sm:$0xff] %vm254, %v227
        %261 = vst.msk [vmem:[#allocation2 + $0x28] sm:$0x3] %vm257, %v229
        %262 = vst.msk [vmem:[#allocation2 + $0x30] sm:$0xff] %vm254, %v231
        %263 = vst.msk [vmem:[#allocation2 + $0x38] sm:$0xff] %vm254, %v233
        %264 = vst.msk [vmem:[#allocation2 + $0x40] sm:$0x3] %vm257, %v235
        %265 = vst.msk [vmem:[#allocation2 + $0x48] sm:$0xff] %vm254, %v237
        %266 = vst.msk [vmem:[#allocation2 + $0x50] sm:$0xff] %vm254, %v239
        %267 = vst.msk [vmem:[#allocation2 + $0x58] sm:$0x3] %vm257, %v241
        %v268 = vld [vmem:[#allocation2] sm:$0xff]
        %v269 = vld [vmem:[#allocation2 + $0x8] sm:$0xff]
        %v270 = vld [vmem:[#allocation2 + $0x10] sm:$0x3]
        %v271 = vld [vmem:[#allocation2 + $0x18] sm:$0xff]
        %v272 = vld [vmem:[#allocation2 + $0x20] sm:$0xff]
        %v273 = vld [vmem:[#allocation2 + $0x28] sm:$0x3]
        %v274 = vld [vmem:[#allocation2 + $0x30] sm:$0xff]
        %v275 = vld [vmem:[#allocation2 + $0x38] sm:$0xff]
        %v276 = vld [vmem:[#allocation2 + $0x40] sm:$0x3]
        %v277 = vld [vmem:[#allocation2 + $0x48] sm:$0xff]
        %v278 = vld [vmem:[#allocation2 + $0x50] sm:$0xff]
        %v279 = vld [vmem:[#allocation2 + $0x58] sm:$0x3]
        %292 = vrot.lane.b32.xlu0 %v268, 2
        %v293 = vpop.permute.xlu0 %292
        %294 = vrot.lane.b32.xlu0 %v269, 2
        %v295 = vpop.permute.xlu0 %294
        %296 = vrot.lane.b32.xlu0 %v270, 2
        %v297 = vpop.permute.xlu0 %296
        %298 = vrot.lane.b32.xlu0 %v271, 2
        %v299 = vpop.permute.xlu0 %298
        %300 = vrot.lane.b32.xlu0 %v272, 2
        %v301 = vpop.permute.xlu0 %300
        %302 = vrot.lane.b32.xlu0 %v273, 2
        %v303 = vpop.permute.xlu0 %302
        %304 = vrot.lane.b32.xlu0 %v274, 2
        %v305 = vpop.permute.xlu0 %304
        %306 = vrot.lane.b32.xlu0 %v275, 2
        %v307 = vpop.permute.xlu0 %306
        %308 = vrot.lane.b32.xlu0 %v276, 2
        %v309 = vpop.permute.xlu0 %308
        %310 = vrot.lane.b32.xlu0 %v277, 2
        %v311 = vpop.permute.xlu0 %310
        %312 = vrot.lane.b32.xlu0 %v278, 2
        %v313 = vpop.permute.xlu0 %312
        %314 = vrot.lane.b32.xlu0 %v279, 2
        %v315 = vpop.permute.xlu0 %314
        %vm328 = vcmask 146568
        %329 = vst.msk [vmem:[#allocation2] sm:$0xff] %vm328, %v293
        %330 = vst.msk [vmem:[#allocation2 + $0x8] sm:$0xff] %vm328, %v295
        %vm331 = vcmask 140424
        %332 = vst.msk [vmem:[#allocation2 + $0x10] sm:$0x3] %vm331, %v297
        %333 = vst.msk [vmem:[#allocation2 + $0x18] sm:$0xff] %vm328, %v299
        %334 = vst.msk [vmem:[#allocation2 + $0x20] sm:$0xff] %vm328, %v301
        %335 = vst.msk [vmem:[#allocation2 + $0x28] sm:$0x3] %vm331, %v303
        %336 = vst.msk [vmem:[#allocation2 + $0x30] sm:$0xff] %vm328, %v305
        %337 = vst.msk [vmem:[#allocation2 + $0x38] sm:$0xff] %vm328, %v307
        %338 = vst.msk [vmem:[#allocation2 + $0x40] sm:$0x3] %vm331, %v309
        %339 = vst.msk [vmem:[#allocation2 + $0x48] sm:$0xff] %vm328, %v311
        %340 = vst.msk [vmem:[#allocation2 + $0x50] sm:$0xff] %vm328, %v313
        %341 = vst.msk [vmem:[#allocation2 + $0x58] sm:$0x3] %vm331, %v315
        %v342 = vld [vmem:[#allocation2] sm:$0xff]
        %v343 = vld [vmem:[#allocation2 + $0x8] sm:$0xff]
        %v344 = vld [vmem:[#allocation2 + $0x18] sm:$0xff]
        %v345 = vld [vmem:[#allocation2 + $0x20] sm:$0xff]
        %v346 = vld [vmem:[#allocation2 + $0x30] sm:$0xff]
        %v347 = vld [vmem:[#allocation2 + $0x38] sm:$0xff]
        %v348 = vld [vmem:[#allocation2 + $0x48] sm:$0xff]
        %v349 = vld [vmem:[#allocation2 + $0x50] sm:$0xff]
        %v350 = vmul.f32 %v342, 0.09272289
        %v351 = vmul.f32 %v343, 0.09272289
        %v352 = vmul.f32 %v344, 0.09272289
        %v353 = vmul.f32 %v345, 0.09272289
        %v354 = vmul.f32 %v346, 0.09272289
        %v355 = vmul.f32 %v347, 0.09272289
        %v356 = vmul.f32 %v348, 0.09272289
        %v357 = vmul.f32 %v349, 0.09272289
        %v358 = vadd.f32 %v350, 0.0
        %v359 = vadd.f32 %v351, 0.0
        %v360 = vadd.f32 %v352, 0.0
        %v361 = vadd.f32 %v353, 0.0
        %v362 = vadd.f32 %v354, 0.0
        %v363 = vadd.f32 %v355, 0.0
        %v364 = vadd.f32 %v356, 0.0
        %v365 = vadd.f32 %v357, 0.0
        %v366 = vmul.f32 %v342, 0.11905856
        %v367 = vmul.f32 %v343, 0.11905856
        %v368 = vmul.f32 %v344, 0.11905856
        %v369 = vmul.f32 %v345, 0.11905856
        %v370 = vmul.f32 %v346, 0.11905856
        %v371 = vmul.f32 %v347, 0.11905856
        %v372 = vmul.f32 %v348, 0.11905856
        %v373 = vmul.f32 %v349, 0.11905856
        %382 = vrot.lane.b32.xlu0 %v366, 127
        %v383 = vpop.permute.xlu0 %382
        %384 = vrot.lane.b32.xlu0 %v367, 127
        %v385 = vpop.permute.xlu0 %384
        %386 = vrot.lane.b32.xlu0 %v368, 127
        %v387 = vpop.permute.xlu0 %386
        %388 = vrot.lane.b32.xlu0 %v369, 127
        %v389 = vpop.permute.xlu0 %388
        %390 = vrot.lane.b32.xlu0 %v370, 127
        %v391 = vpop.permute.xlu0 %390
        %392 = vrot.lane.b32.xlu0 %v371, 127
        %v393 = vpop.permute.xlu0 %392
        %394 = vrot.lane.b32.xlu0 %v372, 127
        %v395 = vpop.permute.xlu0 %394
        %396 = vrot.lane.b32.xlu0 %v373, 127
        %v397 = vpop.permute.xlu0 %396
        %v406 = vadd.f32 %v358, %v383
        %v407 = vadd.f32 %v359, %v385
        %v408 = vadd.f32 %v360, %v387
        %v409 = vadd.f32 %v361, %v389
        %v410 = vadd.f32 %v362, %v391
        %v411 = vadd.f32 %v363, %v393
        %v412 = vadd.f32 %v364, %v395
        %v413 = vadd.f32 %v365, %v397
        %422 = vrot.lane.b32.xlu0 %v350, 126
        %v423 = vpop.permute.xlu0 %422
        %424 = vrot.lane.b32.xlu0 %v351, 126
        %v425 = vpop.permute.xlu0 %424
        %426 = vrot.lane.b32.xlu0 %v352, 126
        %v427 = vpop.permute.xlu0 %426
        %428 = vrot.lane.b32.xlu0 %v353, 126
        %v429 = vpop.permute.xlu0 %428
        %430 = vrot.lane.b32.xlu0 %v354, 126
        %v431 = vpop.permute.xlu0 %430
        %432 = vrot.lane.b32.xlu0 %v355, 126
        %v433 = vpop.permute.xlu0 %432
        %434 = vrot.lane.b32.xlu0 %v356, 126
        %v435 = vpop.permute.xlu0 %434
        %436 = vrot.lane.b32.xlu0 %v357, 126
        %v437 = vpop.permute.xlu0 %436
        %v446 = vadd.f32 %v406, %v423
        %v447 = vadd.f32 %v407, %v425
        %v448 = vadd.f32 %v408, %v427
        %v449 = vadd.f32 %v409, %v429
        %v450 = vadd.f32 %v410, %v431
        %v451 = vadd.f32 %v411, %v433
        %v452 = vadd.f32 %v412, %v435
        %v453 = vadd.f32 %v413, %v437
        %v454 = vld [vmem:[#allocation2 + $0x1] sm:$0xff]
        %v455 = vld [vmem:[#allocation2 + $0x9] sm:$0xff]
        %v456 = vld [vmem:[#allocation2 + $0x19] sm:$0xff]
        %v457 = vld [vmem:[#allocation2 + $0x21] sm:$0xff]
        %v458 = vld [vmem:[#allocation2 + $0x31] sm:$0xff]
        %v459 = vld [vmem:[#allocation2 + $0x39] sm:$0xff]
        %v460 = vld [vmem:[#allocation2 + $0x49] sm:$0xff]
        %v461 = vld [vmem:[#allocation2 + $0x51] sm:$0xff]
        %v462 = vmul.f32 %v454, 0.11905856
        %v463 = vmul.f32 %v455, 0.11905856
        %v464 = vmul.f32 %v456, 0.11905856
        %v465 = vmul.f32 %v457, 0.11905856
        %v466 = vmul.f32 %v458, 0.11905856
        %v467 = vmul.f32 %v459, 0.11905856
        %v468 = vmul.f32 %v460, 0.11905856
        %v469 = vmul.f32 %v461, 0.11905856
        %v470 = vadd.f32 %v446, %v462
        %v471 = vadd.f32 %v447, %v463
        %v472 = vadd.f32 %v448, %v464
        %v473 = vadd.f32 %v449, %v465
        %v474 = vadd.f32 %v450, %v466
        %v475 = vadd.f32 %v451, %v467
        %v476 = vadd.f32 %v452, %v468
        %v477 = vadd.f32 %v453, %v469
        %v478 = vmul.f32 %v454, 0.1528742
        %v479 = vmul.f32 %v455, 0.1528742
        %v480 = vmul.f32 %v456, 0.1528742
        %v481 = vmul.f32 %v457, 0.1528742
        %v482 = vmul.f32 %v458, 0.1528742
        %v483 = vmul.f32 %v459, 0.1528742
        %v484 = vmul.f32 %v460, 0.1528742
        %v485 = vmul.f32 %v461, 0.1528742
        %494 = vrot.lane.b32.xlu0 %v478, 127
        %v495 = vpop.permute.xlu0 %494
        %496 = vrot.lane.b32.xlu0 %v479, 127
        %v497 = vpop.permute.xlu0 %496
        %498 = vrot.lane.b32.xlu0 %v480, 127
        %v499 = vpop.permute.xlu0 %498
        %500 = vrot.lane.b32.xlu0 %v481, 127
        %v501 = vpop.permute.xlu0 %500
        %502 = vrot.lane.b32.xlu0 %v482, 127
        %v503 = vpop.permute.xlu0 %502
        %504 = vrot.lane.b32.xlu0 %v483, 127
        %v505 = vpop.permute.xlu0 %504
        %506 = vrot.lane.b32.xlu0 %v484, 127
        %v507 = vpop.permute.xlu0 %506
        %508 = vrot.lane.b32.xlu0 %v485, 127
        %v509 = vpop.permute.xlu0 %508
        %v518 = vadd.f32 %v470, %v495
        %v519 = vadd.f32 %v471, %v497
        %v520 = vadd.f32 %v472, %v499
        %v521 = vadd.f32 %v473, %v501
        %v522 = vadd.f32 %v474, %v503
        %v523 = vadd.f32 %v475, %v505
        %v524 = vadd.f32 %v476, %v507
        %v525 = vadd.f32 %v477, %v509
        %534 = vrot.lane.b32.xlu0 %v462, 126
        %v535 = vpop.permute.xlu0 %534
        %536 = vrot.lane.b32.xlu0 %v463, 126
        %v537 = vpop.permute.xlu0 %536
        %538 = vrot.lane.b32.xlu0 %v464, 126
        %v539 = vpop.permute.xlu0 %538
        %540 = vrot.lane.b32.xlu0 %v465, 126
        %v541 = vpop.permute.xlu0 %540
        %542 = vrot.lane.b32.xlu0 %v466, 126
        %v543 = vpop.permute.xlu0 %542
        %544 = vrot.lane.b32.xlu0 %v467, 126
        %v545 = vpop.permute.xlu0 %544
        %546 = vrot.lane.b32.xlu0 %v468, 126
        %v547 = vpop.permute.xlu0 %546
        %548 = vrot.lane.b32.xlu0 %v469, 126
        %v549 = vpop.permute.xlu0 %548
        %v558 = vadd.f32 %v518, %v535
        %v559 = vadd.f32 %v519, %v537
        %v560 = vadd.f32 %v520, %v539
        %v561 = vadd.f32 %v521, %v541
        %v562 = vadd.f32 %v522, %v543
        %v563 = vadd.f32 %v523, %v545
        %v564 = vadd.f32 %v524, %v547
        %v565 = vadd.f32 %v525, %v549
        %v566 = vld [vmem:[#allocation2 + $0x2] sm:$0xff]
        %v567 = vld [vmem:[#allocation2 + $0xa] sm:$0xff]
        %v568 = vld [vmem:[#allocation2 + $0x1a] sm:$0xff]
        %v569 = vld [vmem:[#allocation2 + $0x22] sm:$0xff]
        %v570 = vld [vmem:[#allocation2 + $0x32] sm:$0xff]
        %v571 = vld [vmem:[#allocation2 + $0x3a] sm:$0xff]
        %v572 = vld [vmem:[#allocation2 + $0x4a] sm:$0xff]
        %v573 = vld [vmem:[#allocation2 + $0x52] sm:$0xff]
        %v574 = vmul.f32 %v566, 0.09272289
        %v575 = vmul.f32 %v567, 0.09272289
        %v576 = vmul.f32 %v568, 0.09272289
        %v577 = vmul.f32 %v569, 0.09272289
        %v578 = vmul.f32 %v570, 0.09272289
        %v579 = vmul.f32 %v571, 0.09272289
        %v580 = vmul.f32 %v572, 0.09272289
        %v581 = vmul.f32 %v573, 0.09272289
        %v582 = vadd.f32 %v558, %v574
        %v583 = vadd.f32 %v559, %v575
        %v584 = vadd.f32 %v560, %v576
        %v585 = vadd.f32 %v561, %v577
        %v586 = vadd.f32 %v562, %v578
        %v587 = vadd.f32 %v563, %v579
        %v588 = vadd.f32 %v564, %v580
        %v589 = vadd.f32 %v565, %v581
        %v590 = vmul.f32 %v566, 0.11905856
        %v591 = vmul.f32 %v567, 0.11905856
        %v592 = vmul.f32 %v568, 0.11905856
        %v593 = vmul.f32 %v569, 0.11905856
        %v594 = vmul.f32 %v570, 0.11905856
        %v595 = vmul.f32 %v571, 0.11905856
        %v596 = vmul.f32 %v572, 0.11905856
        %v597 = vmul.f32 %v573, 0.11905856
        %606 = vrot.lane.b32.xlu0 %v590, 127
        %v607 = vpop.permute.xlu0 %606
        %608 = vrot.lane.b32.xlu0 %v591, 127
        %v609 = vpop.permute.xlu0 %608
        %610 = vrot.lane.b32.xlu0 %v592, 127
        %v611 = vpop.permute.xlu0 %610
        %612 = vrot.lane.b32.xlu0 %v593, 127
        %v613 = vpop.permute.xlu0 %612
        %614 = vrot.lane.b32.xlu0 %v594, 127
        %v615 = vpop.permute.xlu0 %614
        %616 = vrot.lane.b32.xlu0 %v595, 127
        %v617 = vpop.permute.xlu0 %616
        %618 = vrot.lane.b32.xlu0 %v596, 127
        %v619 = vpop.permute.xlu0 %618
        %620 = vrot.lane.b32.xlu0 %v597, 127
        %v621 = vpop.permute.xlu0 %620
        %v630 = vadd.f32 %v582, %v607
        %v631 = vadd.f32 %v583, %v609
        %v632 = vadd.f32 %v584, %v611
        %v633 = vadd.f32 %v585, %v613
        %v634 = vadd.f32 %v586, %v615
        %v635 = vadd.f32 %v587, %v617
        %v636 = vadd.f32 %v588, %v619
        %v637 = vadd.f32 %v589, %v621
        %646 = vrot.lane.b32.xlu0 %v574, 126
        %v647 = vpop.permute.xlu0 %646
        %648 = vrot.lane.b32.xlu0 %v575, 126
        %v649 = vpop.permute.xlu0 %648
        %650 = vrot.lane.b32.xlu0 %v576, 126
        %v651 = vpop.permute.xlu0 %650
        %652 = vrot.lane.b32.xlu0 %v577, 126
        %v653 = vpop.permute.xlu0 %652
        %654 = vrot.lane.b32.xlu0 %v578, 126
        %v655 = vpop.permute.xlu0 %654
        %656 = vrot.lane.b32.xlu0 %v579, 126
        %v657 = vpop.permute.xlu0 %656
        %658 = vrot.lane.b32.xlu0 %v580, 126
        %v659 = vpop.permute.xlu0 %658
        %660 = vrot.lane.b32.xlu0 %v581, 126
        %v661 = vpop.permute.xlu0 %660
        %v670 = vadd.f32 %v630, %v647
        %v671 = vadd.f32 %v631, %v649
        %v672 = vadd.f32 %v632, %v651
        %v673 = vadd.f32 %v633, %v653
        %v674 = vadd.f32 %v634, %v655
        %v675 = vadd.f32 %v635, %v657
        %v676 = vadd.f32 %v636, %v659
        %v677 = vadd.f32 %v637, %v661
        %vm678 = vcmask 130048
        %679 = vst.msk [vmem:[%s134] sm:$0xff] %vm678, %v670
        %680 = vst.msk [vmem:[%s134 + $0x8] sm:$0xff] %vm678, %v671
        %681 = vst.msk [vmem:[%s134 + $0x10] sm:$0xff] %vm678, %v672
        %682 = vst.msk [vmem:[%s134 + $0x18] sm:$0xff] %vm678, %v673
        %683 = vst.msk [vmem:[%s134 + $0x20] sm:$0xff] %vm678, %v674
        %684 = vst.msk [vmem:[%s134 + $0x28] sm:$0xff] %vm678, %v675
        %685 = vst.msk [vmem:[%s134 + $0x30] sm:$0xff] %vm678, %v676
        %686 = vst.msk [vmem:[%s134 + $0x38] sm:$0xff] %vm678, %v677
        %s687 = sand.u32 %s52, 1
        %s688 = scalar_lea.sflag [#allocation5], %s687
        %s689 = sand.u32 %s52, 1
        %s690 = smul.addr %s689, 64
        %s691 = scalar_lea.vmem [#allocation6], %s690
        // Predicated region
        $region29: #{gaussian_smoothing.1} parent=23 // pred_check
          %p692 = pneg %p62
        $region30: #{gaussian_smoothing.1} parent=23 // pred_check_branch
          %694 = sbr.rel (%p692) target = $region32
        $region31: #{gaussian_smoothing.1} parent=23 // pred_region
          %s696 = ssub.s32 1024, 1024
          %697 = vsyncadd %s688, %s696
          %s698 = smul.addr %s18, 8
          %s699 = smul.addr %s698, 128
          %s700 = scalar_lea.hbm %s1, %s699
          %s701 = sshll.u32 %s691, 4
          %s702 = int_to_ptr.vmem [resolvable:$true] %s701
          %707 = dma.vmem_to_hbm [thread:$0]  %s702, 1024, %s700, %s688, 128, 128, 8
        $region32: #{gaussian_smoothing.1} parent=23 // pred_fallthru
          _
      $region24: #{gaussian_smoothing.1} parent=5 // pred_fallthru
        _
      %p708 = scmp.le.s32.totalorder 2, %s13
      // Predicated region
      $region33: #{gaussian_smoothing.1} parent=5 // pred_check
        %p709 = pneg %p708
      $region34: #{gaussian_smoothing.1} parent=5 // pred_check_branch
        %711 = sbr.rel (%p709) target = $region36
      $region35: #{gaussian_smoothing.1} parent=5 // pred_region
        %s712 = ssub.s32 %s13, 2
        // Predicated region
        $region37: #{gaussian_smoothing.1} parent=35 // pred_check
          %p713 = pneg %p68
        $region38: #{gaussian_smoothing.1} parent=35 // pred_check_branch
          %715 = sbr.rel (%p713) target = $region40
        $region39: #{gaussian_smoothing.1} parent=35 // pred_region
          %s716 = sand.u32 %s53, 1
          %s717 = scalar_lea.sflag [#allocation5], %s716
          %s718 = sand.u32 %s53, 1
          %s719 = smul.addr %s718, 64
          %s720 = scalar_lea.vmem [#allocation6], %s719
          %721 = dma.done %s717, 1024
        $region40: #{gaussian_smoothing.1} parent=35 // pred_fallthru
          _
      $region36: #{gaussian_smoothing.1} parent=5 // pred_fallthru
        _
    $region6: #{gaussian_smoothing.1} parent=1 // loop_footer
      %s17 = sadd.s32 1, %s13
    $region7: #{gaussian_smoothing.1} parent=1 // loop_footer_branch
      %12 = sbr.rel target = $region3
    $region8: #{gaussian_smoothing.1} parent=1 // loop_exit
      _
    %722 = vsyncpa [#allocation4], 1
    %s723 = scalar_lea.sflag [#allocation4], 1
    %724 = vsyncpa %s723, 1
    %725 = vsyncpa [#allocation5], 1
    %s726 = scalar_lea.sflag [#allocation5], 1
    %727 = vsyncpa %s726, 1

</llo_original>
